<compile_context>
chip_gen: v7x
topology: tpu7x:2x2x1
jax: 0.10.0
libtpu: 0.0.40
codegen_flags: <defaults>
</compile_context>

<pallas_src>
import functools

import jax
import jax.numpy as jnp
from jax.experimental import pallas as pl
from jax.experimental.pallas import tpu as pltpu

_LANE = 128
# VMEM budget used to size the spatial tile: double-buffered input blocks
# plus ~10 live f32 temporaries per position.  20 MiB keeps the kernel under
# the 32 MiB scoped defaults of v6e/v7x and well inside v7x's 64 MiB core.
_VMEM_BUDGET = 20 * 1024 * 1024
_DEFAULT_SCOPED_VMEM = 16 * 1024 * 1024      # v5e default (smallest of any gen)


def _focal_loss_kernel(x_ref, t_ref, out_ref, *, num_classes, gamma, alpha,
                       s_total, s_tile, needs_row_mask):
    j = pl.program_id(1)

    # int8 targets (HBM-byte saver) -> int32 once per tile; all later
    # compares/selects then share the 32-bit sublane layout of the f32 math.
    tgt = t_ref[0].astype(jnp.int32)                        # (s_tile, 128)

    # Pass 1: class-axis max and one-hot "gather" of the target logit (and
    # its alpha weight), unrolled over the small class axis.  Runs in the
    # input dtype (max/select are exact in bf16); nothing is upcast until the
    # exp/log stage and no per-class f32 copy stays live across the body.
    row = x_ref[0, 0]
    m = row
    sel_x = row
    for c in range(1, num_classes):
        row = x_ref[0, c]
        m = jnp.maximum(m, row)
        sel_x = jnp.where(tgt == c, row, sel_x)
    m = m.astype(jnp.float32)
    sel_x = sel_x.astype(jnp.float32)

    at = None
    if alpha is not None:
        at = jnp.full(tgt.shape, jnp.float32(alpha[0]), jnp.float32)
        for c in range(1, num_classes):
            at = jnp.where(tgt == c, jnp.float32(alpha[c]), at)

    # Pass 2: class-axis sum-exp, re-reading rows from VMEM (vld slots have
    # large slack in this HBM-bound kernel) instead of retaining f32 copies.
    s = jnp.exp(x_ref[0, 0].astype(jnp.float32) - m)
    for c in range(1, num_classes):
        s = s + jnp.exp(x_ref[0, c].astype(jnp.float32) - m)

    logpt = sel_x - m - jnp.log(s)                          # log_softmax[target]
    pt = jnp.exp(logpt)
    if at is not None:
        logpt = logpt * at

    # (1 - pt) ** gamma.  Clamp at 0 so rounding can never feed a negative
    # base into the fractional-gamma pow (exp(g*log(.)) -> NaN); small
    # integer gamma stays on the VPU as repeated multiplies.
    omp = jnp.maximum(1.0 - pt, 0.0)
    if float(gamma) == float(int(gamma)) and 0 <= int(gamma) <= 8:
        focal = None
        for _ in range(int(gamma)):
            focal = omp if focal is None else focal * omp
    else:
        focal = omp ** jnp.float32(gamma)

    loss = -logpt if focal is None else -(focal * logpt)

    # Mask padded / out-of-range positions.  Spatial lane-padding carries
    # target = -1; rows of a ragged last spatial block hold garbage and are
    # masked by index (the select keeps any NaN/Inf from propagating).
    # Out-of-range class ids contribute 0 loss (documented precondition --
    # torch.gather would raise instead).
    valid = (tgt >= 0) & (tgt < num_classes)
    if needs_row_mask:
        row_idx = j * s_tile + jax.lax.broadcasted_iota(jnp.int32, loss.shape, 0)
        valid = valid & (row_idx < s_total)
    loss = jnp.where(valid, loss, 0.0)

    # Per-step sublane reduce straight out of registers: no big accumulator
    # RMW, no cross-step carry, both grid axes stay fully independent.
    out_ref[...] = jnp.sum(loss, axis=0)[None, None, None, :]


def _static_alpha(alpha, num_classes):
    if alpha is None:
        return None
    if isinstance(alpha, (int, float)):
        a = [float(alpha), 1.0 - float(alpha)]              # matches PyTorch ctor
    else:
        a = [float(v) for v in alpha]
    assert len(a) == num_classes, "alpha must have one weight per class"
    return tuple(a)


def focal_loss(logits, target, *, gamma=0.0, alpha=None, size_average=True,
               max_s_tile=2048):
    """Forward pass of FocalLoss(gamma, alpha, size_average).

    logits: (N, C, H, W) float class scores.  bf16 may (and should) be passed
        directly; the kernel upcasts after the (halved) HBM read.
    target: (N, H, W) integer class indices in [0, C).
    """
    N, C, H, W = logits.shape
    HW = H * W
    M = N * HW                                              # mean denominator

    x = logits.reshape(N, C, HW)                            # free (NCHW contiguous)
    t = target.reshape(N, HW)
    # Targets travel as int8 when the class count allows it (4x fewer HBM
    # bytes than int32); the kernel widens them once per tile.
    t_dtype = jnp.int8 if C <= 127 else jnp.int32
    t = t.astype(t_dtype)

    # Pad the spatial axis up to a lane multiple.  Only copies on the ragged
    # path (HW % 128 != 0); the typical aligned case reshapes for free.
    # Padded targets are -1 and masked inside the kernel.
    S = (HW + _LANE - 1) // _LANE
    hw_pad = S * _LANE
    if hw_pad != HW:
        # TODO(synk): the ragged-HW path still pays one XLA pad pass over the
        # logits; a manual-DMA tail block would remove it but is not worth
        # the complexity for the uncommon unaligned case.
        x = jnp.pad(x, ((0, 0), (0, 0), (0, hw_pad - HW)))
        t = jnp.pad(t, ((0, 0), (0, hw_pad - HW)), constant_values=-1)

    x = x.reshape(N, C, S, _LANE)                           # free reshape
    t = t.reshape(N, S, _LANE)

    # Spatial tile sized from class count / dtypes against a fixed VMEM
    # budget (double-buffered inputs + ~10 live f32 temporaries / position)
    # instead of a fixed constant that only held for C=4.
    x_bytes = jnp.dtype(x.dtype).itemsize
    t_bytes = jnp.dtype(t.dtype).itemsize
    per_row = 2 * (C * x_bytes + t_bytes) * _LANE + 10 * 4 * _LANE
    s_tile = max(8, min(int(max_s_tile), _VMEM_BUDGET // per_row))
    s_tile = (s_tile // 8) * 8                              # sublane multiple
    if S <= s_tile:
        s_tile = S                                          # full-extent block
    num_j = pl.cdiv(S, s_tile)
    needs_row_mask = (S % s_tile) != 0                      # ragged tail -> mask

    # Raise scoped VMEM only when the footprint actually exceeds the smallest
    # per-generation default (v5e: 16 MiB); 32 MiB is safe on every gen.
    footprint = (2 * (C * x_bytes + t_bytes) * s_tile * _LANE
                 + 12 * 4 * s_tile * _LANE + (1 << 20))
    vmem_limit = None if footprint <= _DEFAULT_SCOPED_VMEM else 32 * 1024 * 1024

    kernel = functools.partial(
        _focal_loss_kernel,
        num_classes=C,
        gamma=float(gamma),
        alpha=_static_alpha(alpha, C),
        s_total=S,
        s_tile=s_tile,
        needs_row_mask=needs_row_mask,
    )

    partials = pl.pallas_call(
        kernel,
        out_shape=jax.ShapeDtypeStruct((N, num_j, 1, _LANE), jnp.float32),
        grid_spec=pltpu.PrefetchScalarGridSpec(
            num_scalar_prefetch=0,
            grid=(N, num_j),
            in_specs=[
                pl.BlockSpec((1, C, s_tile, _LANE), lambda n, j: (n, 0, j, 0)),
                pl.BlockSpec((1, s_tile, _LANE), lambda n, j: (n, j, 0)),
            ],
            out_specs=pl.BlockSpec((1, 1, 1, _LANE), lambda n, j: (n, j, 0, 0)),
        ),
        compiler_params=pltpu.CompilerParams(
            dimension_semantics=("parallel", "parallel"),
            vmem_limit_bytes=vmem_limit,
        ),
    )(x, t)

    total = jnp.sum(partials)                               # tiny (N,num_j,128) reduce
    if size_average:
        return total / jnp.float32(M)
    return total


def _focal_loss_ref(logits, target, *, gamma, alpha, size_average):
    N, C, H, W = logits.shape
    x = jnp.transpose(logits, (0, 2, 3, 1)).reshape(-1, C).astype(jnp.float32)
    t = target.reshape(-1).astype(jnp.int32)
    logp = jax.nn.log_softmax(x, axis=-1)
    logpt = jnp.take_along_axis(logp, t[:, None], axis=1)[:, 0]
    pt = jnp.exp(logpt)
    if alpha is not None:
        if isinstance(alpha, (int, float)):
            a = jnp.asarray([alpha, 1.0 - alpha], dtype=jnp.float32)
        else:
            a = jnp.asarray(alpha, dtype=jnp.float32)
        logpt = logpt * a[t]
    loss = -1.0 * (1.0 - pt) ** gamma * logpt
    return loss.mean() if size_average else loss.sum()


if __name__ == "__main__":
    key = jax.random.PRNGKey(0)
    k1, k2, k3, k4, k5, k6 = jax.random.split(key, 6)

    # Case 1: module-spec shapes, per-class alpha, gamma=2 (integer VPU path),
    # lane-aligned spatial size (no pad copy), mean reduction.
    N, C, H, W = 2, 4, 16, 16
    logits = jax.random.normal(k1, (N, C, H, W), dtype=jnp.float32)
    target = jax.random.randint(k2, (N, H, W), 0, C, dtype=jnp.int32)
    out = jax.block_until_ready(
        focal_loss(logits, target, gamma=2.0, alpha=[0.1, 0.2, 0.3, 0.4],
                   size_average=True))
    ref = _focal_loss_ref(logits, target, gamma=2.0, alpha=[0.1, 0.2, 0.3, 0.4],
                          size_average=True)
    assert jnp.allclose(out, ref, rtol=2e-5, atol=1e-5), (out, ref)

    # Case 2: awkward spatial size (lane padding + -1 target masking),
    # fractional gamma (clamped pow path), no alpha, sum reduction.
    logits2 = jax.random.normal(k3, (1, 3, 10, 15), dtype=jnp.float32)
    target2 = jax.random.randint(k4, (1, 10, 15), 0, 3, dtype=jnp.int32)
    out2 = jax.block_until_ready(
        focal_loss(logits2, target2, gamma=1.5, alpha=None, size_average=False))
    ref2 = _focal_loss_ref(logits2, target2, gamma=1.5, alpha=None,
                           size_average=False)
    assert jnp.allclose(out2, ref2, rtol=2e-5, atol=1e-4), (out2, ref2)

    # Case 3: bf16 logits consumed directly (halved HBM bytes), scalar alpha
    # (PyTorch binary [alpha, 1-alpha] form), several spatial tiles per batch
    # row with a ragged last tile (exercises the row mask), mean reduction.
    N3, C3, H3, W3 = 2, 2, 48, 48
    logits3 = jax.random.normal(k5, (N3, C3, H3, W3), dtype=jnp.bfloat16)
    target3 = jax.random.randint(k6, (N3, H3, W3), 0, C3, dtype=jnp.int32)
    out3 = jax.block_until_ready(
        focal_loss(logits3, target3, gamma=2.0, alpha=0.25, size_average=True,
                   max_s_tile=8))
    ref3 = _focal_loss_ref(logits3, target3, gamma=2.0, alpha=0.25,
                           size_average=True)
    assert jnp.allclose(out3, ref3, rtol=2e-4, atol=1e-4), (out3, ref3)

    print("KERNEL_OK")
</pallas_src>

<mosaic_0001>
module attributes {stable_mosaic.version = 11 : i64} {
  func.func @_focal_loss_kernel(%arg0: i32, %arg1: i32, %arg2: memref<1x4x2x128xf32, #tpu.memory_space<vmem>>, %arg3: memref<1x2x128xi8, #tpu.memory_space<vmem>>, %arg4: memref<1x1x1x128xf32, #tpu.memory_space<vmem>>) attributes {dimension_semantics = [#tpu.dimension_semantics<parallel>, #tpu.dimension_semantics<parallel>], iteration_bounds = array<i64: 2, 1>, scalar_prefetch = 0 : i64, scratch_operands = 0 : i64, tpu.core_type = #tpu.core_type<tc>, window_params = [{transform_indices = @transform_0, window_bounds = array<i64: 1, 4, 2, 128>}, {transform_indices = @transform_1, window_bounds = array<i64: 1, 2, 128>}, {transform_indices = @transform_2, window_bounds = array<i64: 1, 1, 1, 128>}]} {
    %c0 = arith.constant 0 : index
    %c0_0 = arith.constant 0 : index
    %c0_1 = arith.constant 0 : index
    %0 = vector.load %arg3[%c0, %c0_0, %c0_1] : memref<1x2x128xi8, #tpu.memory_space<vmem>>, vector<1x2x128xi8>
    %1 = vector.shape_cast %0 : vector<1x2x128xi8> to vector<2x128xi8>
    %2 = arith.extsi %1 : vector<2x128xi8> to vector<2x128xi32>
    %c0_2 = arith.constant 0 : index
    %c0_3 = arith.constant 0 : index
    %c0_4 = arith.constant 0 : index
    %c0_5 = arith.constant 0 : index
    %3 = vector.load %arg2[%c0_2, %c0_3, %c0_4, %c0_5] : memref<1x4x2x128xf32, #tpu.memory_space<vmem>>, vector<1x1x2x128xf32>
    %4 = vector.shape_cast %3 : vector<1x1x2x128xf32> to vector<2x128xf32>
    %c0_6 = arith.constant 0 : index
    %c1 = arith.constant 1 : index
    %c0_7 = arith.constant 0 : index
    %c0_8 = arith.constant 0 : index
    %5 = vector.load %arg2[%c0_6, %c1, %c0_7, %c0_8] : memref<1x4x2x128xf32, #tpu.memory_space<vmem>>, vector<1x1x2x128xf32>
    %6 = vector.shape_cast %5 : vector<1x1x2x128xf32> to vector<2x128xf32>
    %7 = arith.maximumf %4, %6 : vector<2x128xf32>
    %c1_i32 = arith.constant 1 : i32
    %8 = vector.broadcast %c1_i32 : i32 to vector<2x128xi32>
    %9 = arith.cmpi eq, %2, %8 : vector<2x128xi32>
    %10 = arith.select %9, %6, %4 : vector<2x128xi1>, vector<2x128xf32>
    %c0_9 = arith.constant 0 : index
    %c2 = arith.constant 2 : index
    %c0_10 = arith.constant 0 : index
    %c0_11 = arith.constant 0 : index
    %11 = vector.load %arg2[%c0_9, %c2, %c0_10, %c0_11] : memref<1x4x2x128xf32, #tpu.memory_space<vmem>>, vector<1x1x2x128xf32>
    %12 = vector.shape_cast %11 : vector<1x1x2x128xf32> to vector<2x128xf32>
    %13 = arith.maximumf %7, %12 : vector<2x128xf32>
    %c2_i32 = arith.constant 2 : i32
    %14 = vector.broadcast %c2_i32 : i32 to vector<2x128xi32>
    %15 = arith.cmpi eq, %2, %14 : vector<2x128xi32>
    %16 = arith.select %15, %12, %10 : vector<2x128xi1>, vector<2x128xf32>
    %c0_12 = arith.constant 0 : index
    %c3 = arith.constant 3 : index
    %c0_13 = arith.constant 0 : index
    %c0_14 = arith.constant 0 : index
    %17 = vector.load %arg2[%c0_12, %c3, %c0_13, %c0_14] : memref<1x4x2x128xf32, #tpu.memory_space<vmem>>, vector<1x1x2x128xf32>
    %18 = vector.shape_cast %17 : vector<1x1x2x128xf32> to vector<2x128xf32>
    %19 = arith.maximumf %13, %18 : vector<2x128xf32>
    %c3_i32 = arith.constant 3 : i32
    %20 = vector.broadcast %c3_i32 : i32 to vector<2x128xi32>
    %21 = arith.cmpi eq, %2, %20 : vector<2x128xi32>
    %22 = arith.select %21, %18, %16 : vector<2x128xi1>, vector<2x128xf32>
    %cst = arith.constant 1.000000e-01 : f32
    %23 = vector.broadcast %cst : f32 to vector<2x128xf32>
    %c1_i32_15 = arith.constant 1 : i32
    %24 = vector.broadcast %c1_i32_15 : i32 to vector<2x128xi32>
    %25 = arith.cmpi eq, %2, %24 : vector<2x128xi32>
    %cst_16 = arith.constant 2.000000e-01 : f32
    %26 = vector.broadcast %cst_16 : f32 to vector<2x128xf32>
    %27 = arith.select %25, %26, %23 : vector<2x128xi1>, vector<2x128xf32>
    %c2_i32_17 = arith.constant 2 : i32
    %28 = vector.broadcast %c2_i32_17 : i32 to vector<2x128xi32>
    %29 = arith.cmpi eq, %2, %28 : vector<2x128xi32>
    %cst_18 = arith.constant 3.000000e-01 : f32
    %30 = vector.broadcast %cst_18 : f32 to vector<2x128xf32>
    %31 = arith.select %29, %30, %27 : vector<2x128xi1>, vector<2x128xf32>
    %c3_i32_19 = arith.constant 3 : i32
    %32 = vector.broadcast %c3_i32_19 : i32 to vector<2x128xi32>
    %33 = arith.cmpi eq, %2, %32 : vector<2x128xi32>
    %cst_20 = arith.constant 4.000000e-01 : f32
    %34 = vector.broadcast %cst_20 : f32 to vector<2x128xf32>
    %35 = arith.select %33, %34, %31 : vector<2x128xi1>, vector<2x128xf32>
    %c0_21 = arith.constant 0 : index
    %c0_22 = arith.constant 0 : index
    %c0_23 = arith.constant 0 : index
    %c0_24 = arith.constant 0 : index
    %36 = vector.load %arg2[%c0_21, %c0_22, %c0_23, %c0_24] : memref<1x4x2x128xf32, #tpu.memory_space<vmem>>, vector<1x1x2x128xf32>
    %37 = vector.shape_cast %36 : vector<1x1x2x128xf32> to vector<2x128xf32>
    %38 = arith.subf %37, %19 : vector<2x128xf32>
    %39 = math.exp %38 : vector<2x128xf32>
    %c0_25 = arith.constant 0 : index
    %c1_26 = arith.constant 1 : index
    %c0_27 = arith.constant 0 : index
    %c0_28 = arith.constant 0 : index
    %40 = vector.load %arg2[%c0_25, %c1_26, %c0_27, %c0_28] : memref<1x4x2x128xf32, #tpu.memory_space<vmem>>, vector<1x1x2x128xf32>
    %41 = vector.shape_cast %40 : vector<1x1x2x128xf32> to vector<2x128xf32>
    %42 = arith.subf %41, %19 : vector<2x128xf32>
    %43 = math.exp %42 : vector<2x128xf32>
    %44 = arith.addf %39, %43 : vector<2x128xf32>
    %c0_29 = arith.constant 0 : index
    %c2_30 = arith.constant 2 : index
    %c0_31 = arith.constant 0 : index
    %c0_32 = arith.constant 0 : index
    %45 = vector.load %arg2[%c0_29, %c2_30, %c0_31, %c0_32] : memref<1x4x2x128xf32, #tpu.memory_space<vmem>>, vector<1x1x2x128xf32>
    %46 = vector.shape_cast %45 : vector<1x1x2x128xf32> to vector<2x128xf32>
    %47 = arith.subf %46, %19 : vector<2x128xf32>
    %48 = math.exp %47 : vector<2x128xf32>
    %49 = arith.addf %44, %48 : vector<2x128xf32>
    %c0_33 = arith.constant 0 : index
    %c3_34 = arith.constant 3 : index
    %c0_35 = arith.constant 0 : index
    %c0_36 = arith.constant 0 : index
    %50 = vector.load %arg2[%c0_33, %c3_34, %c0_35, %c0_36] : memref<1x4x2x128xf32, #tpu.memory_space<vmem>>, vector<1x1x2x128xf32>
    %51 = vector.shape_cast %50 : vector<1x1x2x128xf32> to vector<2x128xf32>
    %52 = arith.subf %51, %19 : vector<2x128xf32>
    %53 = math.exp %52 : vector<2x128xf32>
    %54 = arith.addf %49, %53 : vector<2x128xf32>
    %55 = arith.subf %22, %19 : vector<2x128xf32>
    %56 = math.log %54 : vector<2x128xf32>
    %57 = arith.subf %55, %56 : vector<2x128xf32>
    %58 = math.exp %57 : vector<2x128xf32>
    %59 = arith.mulf %57, %35 : vector<2x128xf32>
    %cst_37 = arith.constant 1.000000e+00 : f32
    %60 = vector.broadcast %cst_37 : f32 to vector<2x128xf32>
    %61 = arith.subf %60, %58 : vector<2x128xf32>
    %cst_38 = arith.constant 0.000000e+00 : f32
    %62 = vector.broadcast %cst_38 : f32 to vector<2x128xf32>
    %63 = arith.maximumf %61, %62 : vector<2x128xf32>
    %64 = arith.mulf %63, %63 : vector<2x128xf32>
    %65 = arith.mulf %64, %59 : vector<2x128xf32>
    %cst_39 = arith.constant 0.000000e+00 : f32
    %66 = vector.broadcast %cst_39 : f32 to vector<2x128xf32>
    %67 = arith.subf %66, %65 : vector<2x128xf32>
    %c0_i32 = arith.constant 0 : i32
    %68 = vector.broadcast %c0_i32 : i32 to vector<2x128xi32>
    %69 = arith.cmpi sge, %2, %68 : vector<2x128xi32>
    %c4_i32 = arith.constant 4 : i32
    %70 = vector.broadcast %c4_i32 : i32 to vector<2x128xi32>
    %71 = arith.cmpi slt, %2, %70 : vector<2x128xi32>
    %72 = arith.andi %69, %71 : vector<2x128xi1>
    %cst_40 = arith.constant 0.000000e+00 : f32
    %73 = vector.broadcast %cst_40 : f32 to vector<2x128xf32>
    %74 = arith.select %72, %67, %73 : vector<2x128xi1>, vector<2x128xf32>
    %cst_41 = arith.constant dense<0.000000e+00> : vector<128xf32>
    %75 = vector.multi_reduction <add>, %74, %cst_41 [0] : vector<2x128xf32> to vector<128xf32>
    %76 = vector.shape_cast %75 : vector<128xf32> to vector<1x1x1x128xf32>
    %c0_42 = arith.constant 0 : index
    %c0_43 = arith.constant 0 : index
    %c0_44 = arith.constant 0 : index
    %c0_45 = arith.constant 0 : index
    %77 = vector.load %arg4[%c0_42, %c0_43, %c0_44, %c0_45] : memref<1x1x1x128xf32, #tpu.memory_space<vmem>>, vector<1x1x1x128xf32>
    tpu.vector_store %arg4[%c0_42, %c0_43, %c0_44, %c0_45], %76 {strides = array<i32>} : memref<1x1x1x128xf32, #tpu.memory_space<vmem>>, vector<1x1x1x128xf32>,
    return
  }
  func.func @transform_0(%arg0: i32, %arg1: i32) -> (i32, i32, i32, i32) {
    %c0_i32 = arith.constant 0 : i32
    %c0_i32_0 = arith.constant 0 : i32
    %c0_i32_1 = arith.constant 0 : i32
    return %arg0, %c0_i32, %arg1, %c0_i32_0 : i32, i32, i32, i32
  }
  func.func @transform_1(%arg0: i32, %arg1: i32) -> (i32, i32, i32) {
    %c0_i32 = arith.constant 0 : i32
    %c0_i32_0 = arith.constant 0 : i32
    return %arg0, %arg1, %c0_i32 : i32, i32, i32
  }
  func.func @transform_2(%arg0: i32, %arg1: i32) -> (i32, i32, i32, i32) {
    %c0_i32 = arith.constant 0 : i32
    %c0_i32_0 = arith.constant 0 : i32
    %c0_i32_1 = arith.constant 0 : i32
    return %arg0, %arg1, %c0_i32, %c0_i32_0 : i32, i32, i32, i32
  }
}

</mosaic_0001>

<llo_original>
// kernel: tpu_custom_call.1
$region0: #{tpu_custom_call.1}
  #allocation0 [shape = 'u32[]', space=smem, size = 0x4, offset = 0x4, fixed_abs, tag = 'smem constant byte address 0x4 - core index']
  #allocation1 [shape = 'u32[144,128]{1,0:T(1,128)}', space=vmem, size = 0x12000, scoped, tag = 'internal scratch']
  %s0 = inlined_call_operand.hbm [shape: f32[2,4,2,128], index: 0, kind: input, shape index: {}]
  %s1 = inlined_call_operand.vmem [shape: s8[2,2,128], index: 1, kind: input, shape index: {}]
  %s2 = inlined_call_operand.hbm [shape: f32[2,1,1,128], index: 2, kind: output, shape index: {}]
  %s3 = sld [smem:[#allocation0]]
  $region45: #{tpu_custom_call.1} parent=0
    _
  %s5 = ssub.s32 1, %s3
  %s6 = scalar_select 0, %s5, %s3
  $region1: #{tpu_custom_call.1} parent=0
    #allocation2 [shape = 'u8[8192]{0}', space=vmem, size = 0x2000, scoped, tag = 'input window, operand 0']
    #allocation3 [shape = 's32[2]{0}', space=sflag, size = 0x8, scoped, tag = 'scoped memory for tpu_custom_call.1']
    #allocation4 [shape = 's32[2]{0}', space=sflag, size = 0x8, scoped, tag = 'scoped memory for tpu_custom_call.1']
    #allocation5 [shape = 'u8[1024]{0}', space=vmem, size = 0x400, scoped, tag = 'output window, operand 0']
    %7 = vsyncpa [#allocation3], 0
    %s8 = scalar_lea.sflag [#allocation3], 1
    %9 = vsyncpa %s8, 0
    %10 = vsyncpa [#allocation4], 0
    %s11 = scalar_lea.sflag [#allocation4], 1
    %12 = vsyncpa %s11, 0
    loop: start=0, step=1, limit=4
    $region2: #{tpu_custom_call.1} parent=1 // loop_pre_header
      _
    $region3: #{tpu_custom_call.1} parent=1 // loop_header
      %s14 = sphi 0, %s18
      %p15 = scmp.ge.s32.totalorder %s14, 4
      %s21 = sphi 0, %s33
      %s22 = sphi 0, %s29
      %s23 = sphi 0, %s21
      %s24 = sphi 0, %s22
      %s25 = sphi 0, %s23
      %s26 = sphi 0, %s24
      %s38 = sphi 0, %s40
      %s41 = sphi 0, %s38
      %s42 = sphi 0, %s41
      %s58 = sphi 0, %s42
      %s66 = sphi 0, %s68
      %s69 = sphi 0, %s66
      %s70 = sphi 0, %s69
      %s86 = sphi 0, %s70
      %s94 = sphi 0, %s96
      %s97 = sphi 0, %s94
      %s98 = sphi 0, %s97
      %s114 = sphi 0, %s98
    $region4: #{tpu_custom_call.1} parent=1 // loop_header_branch
      %17 = sbr.rel (%p15) target = $region8
    $region5: #{tpu_custom_call.1} parent=1 // loop_body
      %s19 = ssub.s32 %s14, 1
      %s20 = ssub.s32 %s14, 2
      %s27 = sadd.s32 1, %s22
      %p28 = scmp.ge.s32.totalorder %s27, 1
      %s29 = scalar_select %p28, 0, %s27
      %s30 = sadd.s32 1, %s21
      %s31 = scalar_select %p28, %s30, %s21
      %p32 = scmp.ge.s32.totalorder %s31, 2
      %s33 = scalar_select %p32, 0, %s31
      %s34 = ssub.s32 %s21, %s33
      %s35 = ssub.s32 %s22, %s29
      %s36 = sor.u32 %s34, %s35
      %p37 = scmp.eq.s32.totalorder %s36, 0
      %s39 = sadd.s32 %s38, 1
      %s40 = scalar_select %p37, %s38, %s39
      %p43 = pneg %p37
      %p44 = scmp.eq.s32.totalorder %s14, 1
      %p45 = por %p43, %p44
      %p46 = scmp.ne.s32.totalorder %s38, %s41
      %p47 = scmp.eq.s32.totalorder %s14, 0
      %p48 = por %p46, %p47
      %p49 = scmp.ne.s32.totalorder %s38, %s41
      %p50 = scmp.eq.s32.totalorder %s19, 1
      %p51 = por %p49, %p50
      %p52 = scmp.ne.s32.totalorder %s41, %s42
      %p53 = scmp.eq.s32.totalorder %s19, 0
      %p54 = por %p52, %p53
      %p55 = scmp.ne.s32.totalorder %s41, %s42
      %p56 = scmp.eq.s32.totalorder %s20, 1
      %p57 = por %p55, %p56
      %p59 = scmp.ne.s32.totalorder %s42, %s58
      %p60 = scmp.eq.s32.totalorder %s20, 0
      %p61 = por %p59, %p60
      %s62 = ssub.s32 %s21, %s33
      %s63 = ssub.s32 %s22, %s29
      %s64 = sor.u32 %s62, %s63
      %p65 = scmp.eq.s32.totalorder %s64, 0
      %s67 = sadd.s32 %s66, 1
      %s68 = scalar_select %p65, %s66, %s67
      %p71 = pneg %p65
      %p72 = scmp.eq.s32.totalorder %s14, 1
      %p73 = por %p71, %p72
      %p74 = scmp.ne.s32.totalorder %s66, %s69
      %p75 = scmp.eq.s32.totalorder %s14, 0
      %p76 = por %p74, %p75
      %p77 = scmp.ne.s32.totalorder %s66, %s69
      %p78 = scmp.eq.s32.totalorder %s19, 1
      %p79 = por %p77, %p78
      %p80 = scmp.ne.s32.totalorder %s69, %s70
      %p81 = scmp.eq.s32.totalorder %s19, 0
      %p82 = por %p80, %p81
      %p83 = scmp.ne.s32.totalorder %s69, %s70
      %p84 = scmp.eq.s32.totalorder %s20, 1
      %p85 = por %p83, %p84
      %p87 = scmp.ne.s32.totalorder %s70, %s86
      %p88 = scmp.eq.s32.totalorder %s20, 0
      %p89 = por %p87, %p88
      %s90 = ssub.s32 %s21, %s33
      %s91 = ssub.s32 %s22, %s29
      %s92 = sor.u32 %s90, %s91
      %p93 = scmp.eq.s32.totalorder %s92, 0
      %s95 = sadd.s32 %s94, 1
      %s96 = scalar_select %p93, %s94, %s95
      %p99 = pneg %p93
      %p100 = scmp.eq.s32.totalorder %s14, 1
      %p101 = por %p99, %p100
      %p102 = scmp.ne.s32.totalorder %s94, %s97
      %p103 = scmp.eq.s32.totalorder %s14, 0
      %p104 = por %p102, %p103
      %p105 = scmp.ne.s32.totalorder %s94, %s97
      %p106 = scmp.eq.s32.totalorder %s19, 1
      %p107 = por %p105, %p106
      %p108 = scmp.ne.s32.totalorder %s97, %s98
      %p109 = scmp.eq.s32.totalorder %s19, 0
      %p110 = por %p108, %p109
      %p111 = scmp.ne.s32.totalorder %s97, %s98
      %p112 = scmp.eq.s32.totalorder %s20, 1
      %p113 = por %p111, %p112
      %p115 = scmp.ne.s32.totalorder %s98, %s114
      %p116 = scmp.eq.s32.totalorder %s20, 0
      %p117 = por %p115, %p116
      %p118 = scmp.le.s32.totalorder 1, %s14
      %p119 = scmp.lt.s32.totalorder %s14, 3
      %p120 = pnand %p118, %p119
      %p121 = pneg %p120
      // Predicated region
      $region9: #{tpu_custom_call.1} parent=5 // pred_check
        _
      $region10: #{tpu_custom_call.1} parent=5 // pred_check_branch
        %123 = sbr.rel (%p120) target = $region12
      $region11: #{tpu_custom_call.1} parent=5 // pred_region
        %s124 = ssub.s32 %s14, 1
      $region12: #{tpu_custom_call.1} parent=5 // pred_fallthru
        _
      %p125 = scmp.lt.s32.totalorder %s14, 2
      // Predicated region
      $region13: #{tpu_custom_call.1} parent=5 // pred_check
        %p126 = pneg %p125
      $region14: #{tpu_custom_call.1} parent=5 // pred_check_branch
        %128 = sbr.rel (%p126) target = $region16
      $region15: #{tpu_custom_call.1} parent=5 // pred_region
        // Predicated region
        $region17: #{tpu_custom_call.1} parent=15 // pred_check
          %p129 = pneg %p48
        $region18: #{tpu_custom_call.1} parent=15 // pred_check_branch
          %131 = sbr.rel (%p129) target = $region20
        $region19: #{tpu_custom_call.1} parent=15 // pred_region
          %s132 = sand.u32 %s38, 1
          %s133 = scalar_lea.sflag [#allocation3], %s132
          %s134 = sand.u32 %s38, 1
          %s135 = smul.addr %s134, 8
          %s136 = scalar_lea.vmem [#allocation2], %s135
          %s138 = ssub.s32 128, 128
          %139 = vsyncadd %s133, %s138
          %s140 = smul.addr %s21, 4
          %s141 = sadd.s32 %s22, %s140
          %s142 = smul.addr %s141, 32
          %s143 = scalar_lea.hbm %s0, %s142
          %s144 = sshll.u32 %s136, 4
          %s145 = int_to_ptr.vmem [resolvable:$true] %s144
          %150 = dma.hbm_to_vmem [thread:$0]  %s143, 128, %s145, %s133, 32, 32, 2
        $region20: #{tpu_custom_call.1} parent=15 // pred_fallthru
          _
        // Predicated region
        $region21: #{tpu_custom_call.1} parent=15 // pred_check
          %p151 = pneg %p76
        $region22: #{tpu_custom_call.1} parent=15 // pred_check_branch
          %153 = sbr.rel (%p151) target = $region24
        $region23: #{tpu_custom_call.1} parent=15 // pred_region
          %p154 = scmp.lt.s32.totalorder %s21, 1
          %s155 = scalar_select %p154, %s21, 1
          %p156 = scmp.lt.s32.totalorder %s22, 0
          %s157 = scalar_select %p156, %s22, 0
          %s158 = sadd.s32 %s157, %s155
          %s159 = scalar_lea.vmem %s1, %s158
        $region24: #{tpu_custom_call.1} parent=15 // pred_fallthru
          _
      $region16: #{tpu_custom_call.1} parent=5 // pred_fallthru
        _
      %p160 = scmp.le.s32.totalorder 1, %s14
      %p161 = scmp.lt.s32.totalorder %s14, 3
      %p162 = pnand %p160, %p161
      %p163 = pneg %p162
      // Predicated region
      $region25: #{tpu_custom_call.1} parent=5 // pred_check
        _
      $region26: #{tpu_custom_call.1} parent=5 // pred_check_branch
        %165 = sbr.rel (%p162) target = $region28
      $region27: #{tpu_custom_call.1} parent=5 // pred_region
        %s166 = ssub.s32 %s14, 1
        %s167 = sand.u32 %s41, 1
        %s168 = scalar_lea.sflag [#allocation3], %s167
        %s169 = sand.u32 %s41, 1
        %s170 = smul.addr %s169, 8
        %s171 = scalar_lea.vmem [#allocation2], %s170
        // Predicated region
        $region29: #{tpu_custom_call.1} parent=27 // pred_check
          %p172 = pneg %p54
        $region30: #{tpu_custom_call.1} parent=27 // pred_check_branch
          %174 = sbr.rel (%p172) target = $region32
        $region31: #{tpu_custom_call.1} parent=27 // pred_region
          %175 = dma.done %s168, 128
        $region32: #{tpu_custom_call.1} parent=27 // pred_fallthru
          _
        %s176 = sand.u32 %s41, 1
        %s177 = scalar_lea.sflag [#allocation3], %s176
        %s178 = sand.u32 %s41, 1
        %s179 = smul.addr %s178, 8
        %s180 = scalar_lea.vmem [#allocation2], %s179
        %p181 = pneg %p54
        %p182 = pneg %p51
        %p183 = scmp.lt.s32.totalorder %s23, 1
        %s184 = scalar_select %p183, %s23, 1
        %p185 = scmp.lt.s32.totalorder %s24, 0
        %s186 = scalar_select %p185, %s24, 0
        %s187 = sadd.s32 %s186, %s184
        %s188 = scalar_lea.vmem %s1, %s187
        %p189 = pneg %p82
        %p190 = pneg %p79
        %p191 = pneg %p110
        %p192 = pneg %p107
        %s193 = sand.u32 %s97, 1
        %s194 = scalar_lea.sflag [#allocation4], %s193
        %s195 = sand.u32 %s97, 1
        %s196 = scalar_lea.vmem [#allocation5], %s195
        %p197 = scmp.lt.s32.totalorder %s23, 1
        %s198 = scalar_select %p197, %s23, 1
        %p199 = scmp.lt.s32.totalorder %s24, 0
        %s200 = scalar_select %p199, %s24, 0
        %s201 = sadd.s32 %s200, %s198
        %s202 = scalar_lea.vmem %s1, %s201
        %v203 = vld [vmem:[%s202] sm:$0x1]
        %v204 = vunpack.c.0.s8 %v203
        %v205 = vld [vmem:[%s171] sm:$0x3]
        %s206 = scalar_lea.vmem %s171, 2 [#allocation2]
        %v207 = vld [vmem:[%s206] sm:$0x3]
        %v208 = vmax.f32 %v205, %v207
        %vm209 = vcmp.eq.s32.totalorder %v204, 1
        %v210 = vsel %vm209, %v207, %v205
        %s211 = scalar_lea.vmem %s171, 4 [#allocation2]
        %v212 = vld [vmem:[%s211] sm:$0x3]
        %v213 = vmax.f32 %v208, %v212
        %vm214 = vcmp.eq.s32.totalorder %v204, 2
        %v215 = vsel %vm214, %v212, %v210
        %s216 = scalar_lea.vmem %s171, 6 [#allocation2]
        %v217 = vld [vmem:[%s216] sm:$0x3]
        %v218 = vmax.f32 %v213, %v217
        %vm219 = vcmp.eq.s32.totalorder %v204, 3
        %v220 = vsel %vm219, %v217, %v215
        %v221 = vsel %vm209, 0.2, 0.1
        %v222 = vsel %vm214, 0.3, %v221
        %v223 = vsel %vm219, 0.4, %v222
        %v224 = vsub.f32 %v205, %v218
        %v225 = vmul.f32 %v224, 1.442695
        %v226 = vpow.pop %v225
        %v227 = vsub.f32 %v207, %v218
        %v228 = vmul.f32 %v227, 1.442695
        %v229 = vpow.pop %v228
        %v230 = vadd.f32 %v226, %v229
        %v231 = vsub.f32 %v212, %v218
        %v232 = vmul.f32 %v231, 1.442695
        %v233 = vpow.pop %v232
        %v234 = vadd.f32 %v230, %v233
        %v235 = vsub.f32 %v217, %v218
        %v236 = vmul.f32 %v235, 1.442695
        %v237 = vpow.pop %v236
        %v238 = vadd.f32 %v234, %v237
        %v239 = vsub.f32 %v220, %v218
        %v240 = vlog2.pop %v238
        %v241 = vmul.f32 %v240, 0.6931472
        %v242 = vsub.f32 %v239, %v241
        %v243 = vmul.f32 %v242, 1.442695
        %v244 = vpow.pop %v243
        %v245 = vmul.f32 %v242, %v223
        %v246 = vsub.f32 1.0, %v244
        %v247 = vmax.f32 %v246, 0.0
        %v248 = vmul.f32 %v247, %v247
        %v249 = vmul.f32 %v248, %v245
        %v250 = vsub.f32 0.0, %v249
        %vm251 = vcmp.ge.s32.totalorder %v204, 0
        %vm252 = vcmp.lt.s32.totalorder %v204, 4
        %vm253 = vmand %vm251, %vm252
        %v254 = vsel %vm253, %v250, 0.0
        %vm255 = vcmask 1041408
        %v256 = vsel %vm255, %v254, 0.0
        %v257 = vrot.slane %v256, 4
        %v258 = vadd.f32 %v256, %v257
        %v259 = vrot.slane %v258, 2
        %v260 = vadd.f32 %v258, %v259
        %v261 = vrot.slane %v260, 1
        %v262 = vadd.f32 %v260, %v261
        %263 = vst [vmem:[%s196] sm:$0x1] %v262
        %s264 = sand.u32 %s97, 1
        %s265 = scalar_lea.sflag [#allocation4], %s264
        %s266 = sand.u32 %s97, 1
        %s267 = scalar_lea.vmem [#allocation5], %s266
        // Predicated region
        $region33: #{tpu_custom_call.1} parent=27 // pred_check
          %p268 = pneg %p107
        $region34: #{tpu_custom_call.1} parent=27 // pred_check_branch
          %270 = sbr.rel (%p268) target = $region36
        $region35: #{tpu_custom_call.1} parent=27 // pred_region
          %s272 = ssub.s32 16, 16
          %273 = vsyncadd %s265, %s272
          %s274 = sadd.s32 %s24, %s23
          %s275 = smul.addr %s274, 16
          %s276 = scalar_lea.hbm %s2, %s275
          %s278 = sshll.u32 %s267, 4
          %s279 = int_to_ptr.vmem [resolvable:$true] %s278
          %281 = dma.vmem_to_hbm [thread:$0]  %s279, 16, %s276, %s265
        $region36: #{tpu_custom_call.1} parent=27 // pred_fallthru
          _
      $region28: #{tpu_custom_call.1} parent=5 // pred_fallthru
        _
      %p282 = scmp.le.s32.totalorder 2, %s14
      // Predicated region
      $region37: #{tpu_custom_call.1} parent=5 // pred_check
        %p283 = pneg %p282
      $region38: #{tpu_custom_call.1} parent=5 // pred_check_branch
        %285 = sbr.rel (%p283) target = $region40
      $region39: #{tpu_custom_call.1} parent=5 // pred_region
        %s286 = ssub.s32 %s14, 2
        // Predicated region
        $region41: #{tpu_custom_call.1} parent=39 // pred_check
          %p287 = pneg %p113
        $region42: #{tpu_custom_call.1} parent=39 // pred_check_branch
          %289 = sbr.rel (%p287) target = $region44
        $region43: #{tpu_custom_call.1} parent=39 // pred_region
          %s290 = sand.u32 %s98, 1
          %s291 = scalar_lea.sflag [#allocation4], %s290
          %s292 = sand.u32 %s98, 1
          %s293 = scalar_lea.vmem [#allocation5], %s292
          %294 = dma.done %s291, 16
        $region44: #{tpu_custom_call.1} parent=39 // pred_fallthru
          _
      $region40: #{tpu_custom_call.1} parent=5 // pred_fallthru
        _
    $region6: #{tpu_custom_call.1} parent=1 // loop_footer
      %s18 = sadd.s32 1, %s14
    $region7: #{tpu_custom_call.1} parent=1 // loop_footer_branch
      %13 = sbr.rel target = $region3
    $region8: #{tpu_custom_call.1} parent=1 // loop_exit
      _
    %295 = vsyncpa [#allocation3], 1
    %s296 = scalar_lea.sflag [#allocation3], 1
    %297 = vsyncpa %s296, 1
    %298 = vsyncpa [#allocation4], 1
    %s299 = scalar_lea.sflag [#allocation4], 1
    %300 = vsyncpa %s299, 1

</llo_original>
